<compile_context>
chip_gen: v7x
topology: tpu7x:2x2x1
jax: 0.10.0
libtpu: 0.0.40
codegen_flags: <defaults>
</compile_context>

<pallas_src>
import functools

import numpy as np

import jax
import jax.numpy as jnp
from jax.experimental import pallas as pl
from jax.experimental.pallas import tpu as pltpu


def _round_up(x, m):
    return ((x + m - 1) // m) * m


def _round_down(x, m):
    return (x // m) * m


# ---------------------------------------------------------------------------
# Pallas kernel: fused LayerNorm (affine pre-folded into w/b) + Linear
# ---------------------------------------------------------------------------
def spt_ln_linear_kernel(x_ref, w_ref, b_ref, o_ref):
    # x_ref: (TT, K)   token tile, true (un-padded) feature width K
    # w_ref: (K, Np)   LN-affine-folded weight (bf16 or f32), N zero-padded
    # b_ref: (1, Np)   folded bias (f32), N zero-padded
    # o_ref: (TT, Np)  lane-dense output tile
    x = x_ref[...].astype(jnp.float32)
    k = x.shape[-1]
    inv_k = jnp.float32(1.0 / k)

    # Two-pass LayerNorm statistics in f32 (matches torch.nn.LayerNorm, eps=1e-5).
    mean = jnp.sum(x, axis=-1, keepdims=True) * inv_k
    diff = x - mean
    var = jnp.sum(diff * diff, axis=-1, keepdims=True) * inv_k
    xn = diff * jax.lax.rsqrt(var + jnp.float32(1e-5))

    # MXU matmul: bf16 (default) or f32 inputs, f32 accumulate.
    out = jnp.dot(xn.astype(w_ref.dtype), w_ref[...],
                  preferred_element_type=jnp.float32)
    out = out + b_ref[...]
    o_ref[...] = out.astype(o_ref.dtype)


def _vmem_budget_bytes():
    cap = 64 * 1024 * 1024  # conservative fallback (v7x-sized)
    try:
        cap = int(pltpu.get_tpu_info().vmem_capacity_bytes)
    except Exception:
        pass
    # Leave headroom for compiler scratch (important on v7x's 64 MiB).
    return max(16 * 1024 * 1024, int(0.85 * cap))


def ln_linear_pallas(tokens, w, b, *, token_tile=None, out_dtype=None):
    """tokens: (T, K) -> (T, N).  LayerNorm affine is already folded into w/b."""
    T, K = tokens.shape
    N = w.shape[1]
    out_dtype = tokens.dtype if out_dtype is None else out_dtype

    # Pad ONLY the output feature dim to 128 (lane-dense stores); never beyond.
    Np = _round_up(N, 128)
    w_p = jnp.pad(w, ((0, 0), (0, Np - N)))
    b_p = jnp.pad(b.reshape(1, N).astype(jnp.float32), ((0, 0), (0, Np - N)))

    x_bytes = jnp.dtype(tokens.dtype).itemsize
    w_bytes = jnp.dtype(w_p.dtype).itemsize
    o_bytes = jnp.dtype(out_dtype).itemsize

    budget = _vmem_budget_bytes()
    # Invariant operands (constant index map -> re-DMA skipped; double buffer
    # still allocated, so account for it in the budget).
    fixed = 2 * (K * Np * w_bytes + Np * 4)

    if token_tile is None:
        # v6e/v5e (128 MiB VMEM) -> 1024-row tiles; v7x (64 MiB) -> 512.
        token_tile = 1024 if budget >= 96 * 1024 * 1024 else 512

    if T <= 8:
        tile = T
    else:
        # >= 2 grid steps so ("parallel",) actually spans both v7x TCs /
        # megacore, while amortizing the ~0.35us per-step overhead.
        tile = min(token_tile, _round_up(pl.cdiv(T, 2), 8))
        per_row = 2 * (K * x_bytes + Np * o_bytes)   # double-buffered in + out
        max_rows = max(0, int((0.7 * budget - fixed) // per_row))
        max_tile = max(8, _round_down(max_rows, 8))
        tile = max(8, min(tile, max_tile))

    grid = (pl.cdiv(T, tile),)
    work_set = fixed + 2 * tile * (K * x_bytes + Np * o_bytes)
    vmem_limit = int(min(budget, max(16 * 1024 * 1024, 2 * work_set)))

    cost = pl.CostEstimate(
        flops=2 * T * K * Np,
        transcendentals=T,  # one rsqrt per token row
        bytes_accessed=(T * K * x_bytes + T * Np * o_bytes
                        + K * Np * w_bytes + Np * 4),
    )

    out = pl.pallas_call(
        spt_ln_linear_kernel,
        out_shape=jax.ShapeDtypeStruct((T, Np), out_dtype),
        grid=grid,
        in_specs=[
            # Tokens: true K as the full last-dim extent (no host pad, no mask).
            pl.BlockSpec((tile, K), lambda i: (i, 0)),
            # Invariant operands: same block every step.
            pl.BlockSpec((K, Np), lambda i: (0, 0)),
            pl.BlockSpec((1, Np), lambda i: (0, 0)),
        ],
        out_specs=pl.BlockSpec((tile, Np), lambda i: (i, 0)),
        compiler_params=pltpu.CompilerParams(
            dimension_semantics=("parallel",),
            vmem_limit_bytes=vmem_limit,
        ),
        cost_estimate=cost,
    )(tokens, w_p, b_p)

    return out[:, :N]


# ---------------------------------------------------------------------------
# Host glue: PatchShifting + Unfold, kept in NHWC (single XLA fusion/relayout)
# ---------------------------------------------------------------------------
def build_tokens_nhwc(x, H, W, ms):
    """x: (B, H*W, D) -> tokens (B*L, ms*ms*5*D) in (kh, kw, c) feature order."""
    B, N, D = x.shape
    x_img = x.reshape(B, H, W, D)
    s = ms // 2
    s2 = 2 * s
    xp = jnp.pad(x_img, ((0, 0), (s, s), (s, s), (0, 0)))
    x_lu = xp[:, :H, :W, :]
    x_ru = xp[:, :H, s2:s2 + W, :]
    x_lb = xp[:, s2:s2 + H, :W, :]
    x_rb = xp[:, s2:s2 + H, s2:s2 + W, :]
    cat = jnp.concatenate([x_img, x_lu, x_ru, x_lb, x_rb], axis=-1)  # (B,H,W,5D)
    C5 = 5 * D
    Hp, Wp = H // ms, W // ms
    t = cat.reshape(B, Hp, ms, Wp, ms, C5).transpose(0, 1, 3, 2, 4, 5)
    return t.reshape(B * Hp * Wp, ms * ms * C5)


def _torch_to_nhwc_feature_perm(in_dim, ms):
    """perm[f_nhwc] = f_torch, mapping torch's (c, kh, kw) unfold feature order
    to the NHWC (kh, kw, c) order used by build_tokens_nhwc."""
    C5 = 5 * in_dim
    c = np.arange(C5)
    kh = np.arange(ms)
    kw = np.arange(ms)
    perm = (c[None, None, :] * ms * ms
            + kh[:, None, None] * ms
            + kw[None, :, None]).reshape(-1)
    return jnp.asarray(perm, dtype=jnp.int32)


def shifted_patch_tokenization(x, params, *, H, W, merging_size,
                               token_tile=None, matmul_dtype=jnp.bfloat16,
                               out_dtype=None):
    """x: (B, H*W, in_dim) -> (B, L, dim); matches
    ShiftedPatchTokenization(in_dim, dim, merging_size,
    exist_class_t=False, is_pe=False).forward(x, H, W)
    (CoordLinear approximated by a plain Linear -- see TODO above).

    params are in torch layout: ln_gamma/ln_beta (patch_dim,),
    w (patch_dim, dim) (= torch weight transposed), b (dim,).
    """
    B, N, D = x.shape
    assert N == H * W  # H, W are static Python ints
    ms = merging_size

    tokens = build_tokens_nhwc(x, H, W, ms)  # (B*L, patch_dim), NHWC order

    # Fold the LayerNorm affine into the Linear and permute the torch-layout
    # parameters once to the NHWC feature order (exact up to fp rounding order).
    gamma = params["ln_gamma"].astype(jnp.float32)
    beta = params["ln_beta"].astype(jnp.float32)
    w = params["w"].astype(jnp.float32)
    b = params["b"].astype(jnp.float32)
    perm = _torch_to_nhwc_feature_perm(D, ms)
    w_eff = (gamma[:, None] * w)[perm, :].astype(matmul_dtype)
    b_eff = jnp.dot(beta, w, precision=jax.lax.Precision.HIGHEST) + b  # f32

    out = ln_linear_pallas(tokens, w_eff, b_eff,
                           token_tile=token_tile, out_dtype=out_dtype)
    L = (H // ms) * (W // ms)
    return out.reshape(B, L, -1)


# ---------------------------------------------------------------------------
# Pure-JAX reference reproducing the PyTorch module exactly (NCHW + torch
# unfold feature order + torch-layout params) for verification.
# ---------------------------------------------------------------------------
def reference_spt(x, params, *, H, W, merging_size):
    B, N, D = x.shape
    ms = merging_size
    s = ms // 2
    s2 = 2 * s
    x_nchw = x.reshape(B, H, W, D).transpose(0, 3, 1, 2)
    xp = jnp.pad(x_nchw, ((0, 0), (0, 0), (s, s), (s, s)))
    cat = jnp.concatenate(
        [x_nchw,
         xp[:, :, :H, :W], xp[:, :, :H, s2:s2 + W],
         xp[:, :, s2:s2 + H, :W], xp[:, :, s2:s2 + H, s2:s2 + W]], axis=1)
    C5 = 5 * D
    Hp, Wp = H // ms, W // ms
    # nn.Unfold(kernel=ms, stride=ms) -> (B, C5*ms*ms, L), then transpose(1,2)
    t = cat.reshape(B, C5, Hp, ms, Wp, ms).transpose(0, 2, 4, 1, 3, 5)
    tokens = t.reshape(B, Hp * Wp, C5 * ms * ms).astype(jnp.float32)
    mean = tokens.mean(-1, keepdims=True)
    var = ((tokens - mean) ** 2).mean(-1, keepdims=True)
    y = (tokens - mean) / jnp.sqrt(var + 1e-5)
    y = y * params["ln_gamma"] + params["ln_beta"]
    return jnp.dot(y, params["w"],
                   precision=jax.lax.Precision.HIGHEST) + params["b"]


if __name__ == "__main__":
    # Small shapes consistent with the module: in_dim=4, dim=32, merging_size=2
    B, in_dim, H, W = 2, 4, 8, 8
    merging_size = 2
    dim = 32
    patch_dim = in_dim * 5 * merging_size ** 2      # 80
    L = (H // merging_size) * (W // merging_size)   # 16

    key = jax.random.PRNGKey(0)
    kx, kw_, kb_, kg, kbe = jax.random.split(key, 5)

    x = jax.random.normal(kx, (B, H * W, in_dim), dtype=jnp.float32)

    # Deterministic synthetic parameters in torch layout.
    params = {
        "ln_gamma": (1.0 + 0.1 * jax.random.normal(kg, (patch_dim,))).astype(jnp.float32),
        "ln_beta": (0.1 * jax.random.normal(kbe, (patch_dim,))).astype(jnp.float32),
        "w": (jax.random.normal(kw_, (patch_dim, dim)) / jnp.sqrt(patch_dim)).astype(jnp.float32),
        "b": (0.01 * jax.random.normal(kb_, (dim,))).astype(jnp.float32),
    }

    ref = reference_spt(x, params, H=H, W=W, merging_size=merging_size)

    # Exact (f32 MXU) path: tight match against the PyTorch-equivalent reference.
    fwd_f32 = jax.jit(functools.partial(shifted_patch_tokenization,
                                        H=H, W=W, merging_size=merging_size,
                                        matmul_dtype=jnp.float32))
    out_f32 = jax.block_until_ready(fwd_f32(x, params))
    assert out_f32.shape == (B, L, dim), out_f32.shape
    max_err = float(jnp.max(jnp.abs(out_f32 - ref)))
    assert jnp.allclose(out_f32, ref, atol=1e-3, rtol=1e-3), max_err

    # Default (bf16 MXU inputs, f32 accumulate) path: small, bounded precision
    # trade-off vs the f32 reference.
    fwd_bf16 = jax.jit(functools.partial(shifted_patch_tokenization,
                                         H=H, W=W, merging_size=merging_size))
    out_bf16 = jax.block_until_ready(fwd_bf16(x, params))
    assert out_bf16.shape == (B, L, dim), out_bf16.shape
    rel_err = float(jnp.linalg.norm(out_bf16 - ref) / jnp.linalg.norm(ref))
    assert rel_err < 3e-2, rel_err

    print("KERNEL_OK")
</pallas_src>

<mosaic_0001>
module attributes {stable_mosaic.version = 11 : i64} {
  func.func @spt_ln_linear_kernel(%arg0: i32, %arg1: memref<16x80xf32, #tpu.memory_space<vmem>>, %arg2: memref<80x128xf32, #tpu.memory_space<vmem>>, %arg3: memref<1x128xf32, #tpu.memory_space<vmem>>, %arg4: memref<16x128xf32, #tpu.memory_space<vmem>>) attributes {dimension_semantics = [#tpu.dimension_semantics<parallel>], iteration_bounds = array<i64: 2>, scalar_prefetch = 0 : i64, scratch_operands = 0 : i64, tpu.core_type = #tpu.core_type<tc>, window_params = [{transform_indices = @transform_0, window_bounds = array<i64: 16, 80>}, {pipeline_mode = #tpu.pipeline_mode<synchronous>, transform_indices = @transform_1, window_bounds = array<i64: 80, 128>}, {pipeline_mode = #tpu.pipeline_mode<synchronous>, transform_indices = @transform_2, window_bounds = array<i64: 1, 128>}, {transform_indices = @transform_3, window_bounds = array<i64: 16, 128>}]} {
    %c0 = arith.constant 0 : index
    %c0_0 = arith.constant 0 : index
    %0 = vector.load %arg1[%c0, %c0_0] : memref<16x80xf32, #tpu.memory_space<vmem>>, vector<16x80xf32>
    %cst = arith.constant dense<0.000000e+00> : vector<16xf32>
    %1 = vector.multi_reduction <add>, %0, %cst [1] : vector<16x80xf32> to vector<16xf32>
    %2 = vector.shape_cast %1 : vector<16xf32> to vector<16x1xf32>
    %cst_1 = arith.constant 1.250000e-02 : f32
    %3 = vector.broadcast %cst_1 : f32 to vector<16x1xf32>
    %4 = arith.mulf %2, %3 : vector<16x1xf32>
    %5 = vector.broadcast %4 : vector<16x1xf32> to vector<16x80xf32>
    %6 = arith.subf %0, %5 : vector<16x80xf32>
    %7 = arith.mulf %6, %6 : vector<16x80xf32>
    %cst_2 = arith.constant dense<0.000000e+00> : vector<16xf32>
    %8 = vector.multi_reduction <add>, %7, %cst_2 [1] : vector<16x80xf32> to vector<16xf32>
    %9 = vector.shape_cast %8 : vector<16xf32> to vector<16x1xf32>
    %cst_3 = arith.constant 1.250000e-02 : f32
    %10 = vector.broadcast %cst_3 : f32 to vector<16x1xf32>
    %11 = arith.mulf %9, %10 : vector<16x1xf32>
    %cst_4 = arith.constant 9.99999974E-6 : f32
    %12 = vector.broadcast %cst_4 : f32 to vector<16x1xf32>
    %13 = arith.addf %11, %12 : vector<16x1xf32>
    %14 = math.rsqrt %13 : vector<16x1xf32>
    %15 = vector.broadcast %14 : vector<16x1xf32> to vector<16x80xf32>
    %16 = arith.mulf %6, %15 : vector<16x80xf32>
    %c0_5 = arith.constant 0 : index
    %c0_6 = arith.constant 0 : index
    %17 = vector.load %arg2[%c0_5, %c0_6] : memref<80x128xf32, #tpu.memory_space<vmem>>, vector<80x128xf32>
    %cst_7 = arith.constant dense<0.000000e+00> : vector<16x128xf32>
    %18 = tpu.matmul %16, %17, %cst_7 {dimension_numbers = #tpu.dot_dimension_numbers<[1], [0], [0], [1], [0, 0, 1, 1], [], []>} : vector<16x80xf32>, vector<80x128xf32>, vector<16x128xf32> -> vector<16x128xf32>
    %c0_8 = arith.constant 0 : index
    %c0_9 = arith.constant 0 : index
    %19 = vector.load %arg3[%c0_8, %c0_9] : memref<1x128xf32, #tpu.memory_space<vmem>>, vector<1x128xf32>
    %20 = vector.broadcast %19 : vector<1x128xf32> to vector<16x128xf32>
    %21 = arith.addf %18, %20 : vector<16x128xf32>
    %c0_10 = arith.constant 0 : index
    %c0_11 = arith.constant 0 : index
    %22 = vector.load %arg4[%c0_10, %c0_11] : memref<16x128xf32, #tpu.memory_space<vmem>>, vector<16x128xf32>
    tpu.vector_store %arg4[%c0_10, %c0_11], %21 {strides = array<i32>} : memref<16x128xf32, #tpu.memory_space<vmem>>, vector<16x128xf32>,
    return
  }
  func.func @transform_0(%arg0: i32) -> (i32, i32) {
    %c0_i32 = arith.constant 0 : i32
    %c0_i32_0 = arith.constant 0 : i32
    return %arg0, %c0_i32 : i32, i32
  }
  func.func @transform_1(%arg0: i32) -> (i32, i32) {
    %c0_i32 = arith.constant 0 : i32
    %c0_i32_0 = arith.constant 0 : i32
    %c0_i32_1 = arith.constant 0 : i32
    return %c0_i32, %c0_i32_0 : i32, i32
  }
  func.func @transform_2(%arg0: i32) -> (i32, i32) {
    %c0_i32 = arith.constant 0 : i32
    %c0_i32_0 = arith.constant 0 : i32
    %c0_i32_1 = arith.constant 0 : i32
    return %c0_i32, %c0_i32_0 : i32, i32
  }
  func.func @transform_3(%arg0: i32) -> (i32, i32) {
    %c0_i32 = arith.constant 0 : i32
    %c0_i32_0 = arith.constant 0 : i32
    return %arg0, %c0_i32 : i32, i32
  }
}

</mosaic_0001>

<llo_original>
// kernel: shifted_patch_tokenization.1
$region0: #{shifted_patch_tokenization.1}
  #allocation0 [shape = 'u32[]', space=smem, size = 0x4, offset = 0x4, fixed_abs, tag = 'smem constant byte address 0x4 - core index']
  #allocation1 [shape = 'u32[144,128]{1,0:T(1,128)}', space=vmem, size = 0x12000, scoped, tag = 'internal scratch']
  %s0 = inlined_call_operand.vmem [shape: f32[32,80], index: 0, kind: input, shape index: {}]
  %s1 = inlined_call_operand.vmem [shape: f32[80,128], index: 1, kind: input, shape index: {}]
  %s2 = inlined_call_operand.vmem [shape: f32[1,128], index: 2, kind: input, shape index: {}]
  %s3 = inlined_call_operand.hbm [shape: f32[32,128], index: 3, kind: output, shape index: {}]
  %s4 = sld [smem:[#allocation0]]
  $region45: #{shifted_patch_tokenization.1} parent=0
    _
  %s6 = ssub.s32 1, %s4
  %s7 = scalar_select 0, %s6, %s4
  $region1: #{shifted_patch_tokenization.1} parent=0
    #allocation2 [shape = 'u8[16384]{0}', space=vmem, size = 0x4000, scoped, tag = 'output window, operand 0']
    #allocation3 [shape = 's32[2]{0}', space=sflag, size = 0x8, scoped, tag = 'scoped memory for shifted_patch_tokenization.1']
    %8 = vsyncpa [#allocation3], 0
    %s9 = scalar_lea.sflag [#allocation3], 1
    %10 = vsyncpa %s9, 0
    loop: start=0, step=1, limit=4
    $region2: #{shifted_patch_tokenization.1} parent=1 // loop_pre_header
      _
    $region3: #{shifted_patch_tokenization.1} parent=1 // loop_header
      %s12 = sphi 0, %s16
      %p13 = scmp.ge.s32.totalorder %s12, 4
      %s22 = sphi 0, %s24
      %s25 = sphi 0, %s22
      %s26 = sphi 0, %s25
      %s42 = sphi 0, %s26
      %s46 = sphi 0, %s46
      %s48 = sphi 0, %s46
      %s49 = sphi 0, %s48
      %s63 = sphi 0, %s49
      %s67 = sphi 0, %s67
      %s69 = sphi 0, %s67
      %s70 = sphi 0, %s69
      %s84 = sphi 0, %s70
      %s90 = sphi 0, %s92
      %s93 = sphi 0, %s90
      %s94 = sphi 0, %s93
      %s110 = sphi 0, %s94
    $region4: #{shifted_patch_tokenization.1} parent=1 // loop_header_branch
      %15 = sbr.rel (%p13) target = $region8
    $region5: #{shifted_patch_tokenization.1} parent=1 // loop_body
      %s17 = ssub.s32 %s12, 1
      %s18 = ssub.s32 %s12, 2
      %s19 = sadd.s32 %s12, 1
      %s20 = ssub.s32 %s12, %s19
      %p21 = scmp.eq.s32.totalorder %s20, 0
      %s23 = sadd.s32 %s22, 1
      %s24 = scalar_select %p21, %s22, %s23
      %p27 = pneg %p21
      %p28 = scmp.eq.s32.totalorder %s12, 1
      %p29 = por %p27, %p28
      %p30 = scmp.ne.s32.totalorder %s22, %s25
      %p31 = scmp.eq.s32.totalorder %s12, 0
      %p32 = por %p30, %p31
      %p33 = scmp.ne.s32.totalorder %s22, %s25
      %p34 = scmp.eq.s32.totalorder %s17, 1
      %p35 = por %p33, %p34
      %p36 = scmp.ne.s32.totalorder %s25, %s26
      %p37 = scmp.eq.s32.totalorder %s17, 0
      %p38 = por %p36, %p37
      %p39 = scmp.ne.s32.totalorder %s25, %s26
      %p40 = scmp.eq.s32.totalorder %s18, 1
      %p41 = por %p39, %p40
      %p43 = scmp.ne.s32.totalorder %s26, %s42
      %p44 = scmp.eq.s32.totalorder %s18, 0
      %p45 = por %p43, %p44
      %s47 = sadd.s32 %s46, 1
      %p50 = scmp.eq.s32.totalorder %s12, 1
      %p51 = scmp.ne.s32.totalorder %s46, %s48
      %p52 = scmp.eq.s32.totalorder %s12, 0
      %p53 = por %p51, %p52
      %p54 = scmp.ne.s32.totalorder %s46, %s48
      %p55 = scmp.eq.s32.totalorder %s17, 1
      %p56 = por %p54, %p55
      %p57 = scmp.ne.s32.totalorder %s48, %s49
      %p58 = scmp.eq.s32.totalorder %s17, 0
      %p59 = por %p57, %p58
      %p60 = scmp.ne.s32.totalorder %s48, %s49
      %p61 = scmp.eq.s32.totalorder %s18, 1
      %p62 = por %p60, %p61
      %p64 = scmp.ne.s32.totalorder %s49, %s63
      %p65 = scmp.eq.s32.totalorder %s18, 0
      %p66 = por %p64, %p65
      %s68 = sadd.s32 %s67, 1
      %p71 = scmp.eq.s32.totalorder %s12, 1
      %p72 = scmp.ne.s32.totalorder %s67, %s69
      %p73 = scmp.eq.s32.totalorder %s12, 0
      %p74 = por %p72, %p73
      %p75 = scmp.ne.s32.totalorder %s67, %s69
      %p76 = scmp.eq.s32.totalorder %s17, 1
      %p77 = por %p75, %p76
      %p78 = scmp.ne.s32.totalorder %s69, %s70
      %p79 = scmp.eq.s32.totalorder %s17, 0
      %p80 = por %p78, %p79
      %p81 = scmp.ne.s32.totalorder %s69, %s70
      %p82 = scmp.eq.s32.totalorder %s18, 1
      %p83 = por %p81, %p82
      %p85 = scmp.ne.s32.totalorder %s70, %s84
      %p86 = scmp.eq.s32.totalorder %s18, 0
      %p87 = por %p85, %p86
      %s88 = ssub.s32 %s12, %s19
      %p89 = scmp.eq.s32.totalorder %s88, 0
      %s91 = sadd.s32 %s90, 1
      %s92 = scalar_select %p89, %s90, %s91
      %p95 = pneg %p89
      %p96 = scmp.eq.s32.totalorder %s12, 1
      %p97 = por %p95, %p96
      %p98 = scmp.ne.s32.totalorder %s90, %s93
      %p99 = scmp.eq.s32.totalorder %s12, 0
      %p100 = por %p98, %p99
      %p101 = scmp.ne.s32.totalorder %s90, %s93
      %p102 = scmp.eq.s32.totalorder %s17, 1
      %p103 = por %p101, %p102
      %p104 = scmp.ne.s32.totalorder %s93, %s94
      %p105 = scmp.eq.s32.totalorder %s17, 0
      %p106 = por %p104, %p105
      %p107 = scmp.ne.s32.totalorder %s93, %s94
      %p108 = scmp.eq.s32.totalorder %s18, 1
      %p109 = por %p107, %p108
      %p111 = scmp.ne.s32.totalorder %s94, %s110
      %p112 = scmp.eq.s32.totalorder %s18, 0
      %p113 = por %p111, %p112
      %p114 = scmp.le.s32.totalorder 1, %s12
      %p115 = scmp.lt.s32.totalorder %s12, 3
      %p116 = pnand %p114, %p115
      %p117 = pneg %p116
      // Predicated region
      $region9: #{shifted_patch_tokenization.1} parent=5 // pred_check
        _
      $region10: #{shifted_patch_tokenization.1} parent=5 // pred_check_branch
        %119 = sbr.rel (%p116) target = $region12
      $region11: #{shifted_patch_tokenization.1} parent=5 // pred_region
        %s120 = ssub.s32 %s12, 1
        // Predicated region
        $region13: #{shifted_patch_tokenization.1} parent=11 // pred_check
          %p121 = pneg %p59
        $region14: #{shifted_patch_tokenization.1} parent=11 // pred_check_branch
          %123 = sbr.rel (%p121) target = $region16
        $region15: #{shifted_patch_tokenization.1} parent=11 // pred_region
          _
        $region16: #{shifted_patch_tokenization.1} parent=11 // pred_fallthru
          _
        // Predicated region
        $region17: #{shifted_patch_tokenization.1} parent=11 // pred_check
          %p124 = pneg %p80
        $region18: #{shifted_patch_tokenization.1} parent=11 // pred_check_branch
          %126 = sbr.rel (%p124) target = $region20
        $region19: #{shifted_patch_tokenization.1} parent=11 // pred_region
          _
        $region20: #{shifted_patch_tokenization.1} parent=11 // pred_fallthru
          _
      $region12: #{shifted_patch_tokenization.1} parent=5 // pred_fallthru
        _
      %p127 = scmp.lt.s32.totalorder %s12, 2
      // Predicated region
      $region21: #{shifted_patch_tokenization.1} parent=5 // pred_check
        %p128 = pneg %p127
      $region22: #{shifted_patch_tokenization.1} parent=5 // pred_check_branch
        %130 = sbr.rel (%p128) target = $region24
      $region23: #{shifted_patch_tokenization.1} parent=5 // pred_region
        // Predicated region
        $region25: #{shifted_patch_tokenization.1} parent=23 // pred_check
          %p131 = pneg %p32
        $region26: #{shifted_patch_tokenization.1} parent=23 // pred_check_branch
          %133 = sbr.rel (%p131) target = $region28
        $region27: #{shifted_patch_tokenization.1} parent=23 // pred_region
          %s134 = smul.u32 2, %s12
          %p135 = scmp.lt.s32.totalorder %s134, 3
          %s136 = scalar_select %p135, %s134, 3
          %s137 = smul.addr %s136, 8
          %s138 = scalar_lea.vmem %s0, %s137
          %s139 = smul.u32 2, %s12
        $region28: #{shifted_patch_tokenization.1} parent=23 // pred_fallthru
          _
      $region24: #{shifted_patch_tokenization.1} parent=5 // pred_fallthru
        _
      %p140 = scmp.le.s32.totalorder 1, %s12
      %p141 = scmp.lt.s32.totalorder %s12, 3
      %p142 = pnand %p140, %p141
      %p143 = pneg %p142
      // Predicated region
      $region29: #{shifted_patch_tokenization.1} parent=5 // pred_check
        _
      $region30: #{shifted_patch_tokenization.1} parent=5 // pred_check_branch
        %145 = sbr.rel (%p142) target = $region32
      $region31: #{shifted_patch_tokenization.1} parent=5 // pred_region
        %s146 = ssub.s32 %s12, 1
        %s147 = smul.u32 2, %s17
        %p148 = scmp.lt.s32.totalorder %s147, 3
        %s149 = scalar_select %p148, %s147, 3
        %s150 = smul.addr %s149, 8
        %s151 = scalar_lea.vmem %s0, %s150
        %p152 = pneg %p38
        %p153 = pneg %p35
        %p154 = pneg %p59
        %p155 = pneg %p56
        %p156 = pneg %p80
        %p157 = pneg %p77
        %p158 = pneg %p106
        %p159 = pneg %p103
        %s160 = sand.u32 %s93, 1
        %s161 = scalar_lea.sflag [#allocation3], %s160
        %s162 = sand.u32 %s93, 1
        %s163 = smul.addr %s162, 16
        %s164 = scalar_lea.vmem [#allocation2], %s163
        %s165 = smul.u32 2, %s17
        %p166 = scmp.lt.s32.totalorder %s165, 3
        %s167 = scalar_select %p166, %s165, 3
        %s168 = smul.addr %s167, 8
        %s169 = scalar_lea.vmem %s0, %s168
        %s170 = smul.u32 2, %s17
        %s171 = smul.u32 2, %s17
        %v172 = vld [vmem:[%s169] sm:$0xff]
        %v173 = vld [vmem:[%s169 + $0x8] sm:$0xff]
        %vm174 = vcmask 654336
        %v175 = vsel %vm174, %v172, 0.0
        %176 = vadd.xlane.f32.xlu0 %v175
        %v177 = vpop.xlane.xlu0 %176
        %v178 = vsel %vm174, %v173, 0.0
        %179 = vadd.xlane.f32.xlu0 %v178
        %v180 = vpop.xlane.xlu0 %179
        %v181 = vmul.f32 %v177, 0.0125
        %v182 = vmul.f32 %v180, 0.0125
        %v183 = vsub.f32 %v172, %v181
        %v184 = vsub.f32 %v173, %v182
        %v185 = vmul.f32 %v183, %v183
        %v186 = vmul.f32 %v184, %v184
        %v187 = vsel %vm174, %v185, 0.0
        %188 = vadd.xlane.f32.xlu0 %v187
        %v189 = vpop.xlane.xlu0 %188
        %v190 = vsel %vm174, %v186, 0.0
        %191 = vadd.xlane.f32.xlu0 %v190
        %v192 = vpop.xlane.xlu0 %191
        %v193 = vmul.f32 %v189, 0.0125
        %v194 = vmul.f32 %v192, 0.0125
        %v195 = vadd.f32 %v193, 1e-05
        %v196 = vadd.f32 %v194, 1e-05
        %v197 = vrsqrt.pop %v195
        %v198 = vrsqrt.pop %v196
        %v199 = vmul.f32 %v183, %v197
        %v200 = vmul.f32 %v184, %v198
        %v201 = vld [vmem:[%s1] sm:$0xff]
        %v202 = vld [vmem:[%s1 + $0x8] sm:$0xff]
        %v203 = vld [vmem:[%s1 + $0x10] sm:$0xff]
        %v204 = vld [vmem:[%s1 + $0x18] sm:$0xff]
        %v205 = vld [vmem:[%s1 + $0x20] sm:$0xff]
        %v206 = vld [vmem:[%s1 + $0x28] sm:$0xff]
        %v207 = vld [vmem:[%s1 + $0x30] sm:$0xff]
        %v208 = vld [vmem:[%s1 + $0x38] sm:$0xff]
        %v209 = vld [vmem:[%s1 + $0x40] sm:$0xff]
        %v210 = vld [vmem:[%s1 + $0x48] sm:$0xff]
        %v211 = vld [vmem:[%s2] sm:$0x1]
        %v213 = vlaneseq
        %v214 = vshrl.u32 %v213, 7
        %v215 = vsub.s32 0, %v214
        %v216 = vrot.slane %v211, %v215
        %v219 = vsel %vm174, %v199, 0
        %v222 = vsel %vm174, %v200, 0
        %224 = vmatprep.subr.mxu0 0.0
        %225 = vmatpush1.msra.mxu0 %v201
        %226 = vmatprep.subr.mxu0 0.0
        %227 = vmatpush1.msra.mxu0 %v202
        %228 = vmatprep.subr.mxu0 0.0
        %229 = vmatpush1.msra.mxu0 %v203
        %230 = vmatprep.subr.mxu0 0.0
        %231 = vmatpush1.msra.mxu0 %v204
        %232 = vmatprep.subr.mxu0 0.0
        %233 = vmatpush1.msra.mxu0 %v205
        %234 = vmatprep.subr.mxu0 0.0
        %235 = vmatpush1.msra.mxu0 %v206
        %236 = vmatprep.subr.mxu0 0.0
        %237 = vmatpush1.msra.mxu0 %v207
        %238 = vmatprep.subr.mxu0 0.0
        %239 = vmatpush1.msra.mxu0 %v208
        %240 = vmatprep.subr.mxu0 0.0
        %241 = vmatpush1.msra.mxu0 %v209
        %242 = vmatprep.subr.mxu0 0.0
        %243 = vmatpush1.msra.mxu0 %v210
        %244 = vmatprep.subr.mxu0 0.0
        %245 = vmatpush1.msra.mxu0 0.0
        %246 = vmatprep.subr.mxu0 0.0
        %247 = vmatpush1.msra.mxu0 0.0
        %248 = vmatprep.subr.mxu0 0.0
        %249 = vmatpush1.msra.mxu0 0.0
        %250 = vmatprep.subr.mxu0 0.0
        %251 = vmatpush1.msra.mxu0 0.0
        %252 = vmatprep.subr.mxu0 0.0
        %253 = vmatpush1.msra.mxu0 0.0
        %254 = vmatprep.subr.mxu0 0.0
        %255 = vmatpush1.msra.mxu0 0.0
        %256 = vmatprep.subr.mxu0 0.0
        %257 = vmatpush1.msra.mxu0 0.0
        %258 = vmatprep.subr.mxu0 0.0
        %259 = vmatpush1.msra.mxu0 0.0
        %260 = vmatprep.subr.mxu0 0.0
        %261 = vmatpush1.msra.mxu0 0.0
        %262 = vmatprep.subr.mxu0 0.0
        %263 = vmatpush1.msra.mxu0 0.0
        %264 = vmatprep.subr.mxu0 0.0
        %265 = vmatpush1.msra.mxu0 0.0
        %266 = vmatprep.subr.mxu0 0.0
        %267 = vmatpush1.msra.mxu0 0.0
        %268 = vmatprep.subr.mxu0 0.0
        %269 = vmatpush1.msra.mxu0 0.0
        %270 = vmatprep.subr.mxu0 0.0
        %271 = vmatpush1.msra.mxu0 0.0
        %272 = vmatprep.subr.mxu0 0.0
        %273 = vmatpush1.msra.mxu0 0.0
        %274 = vmatprep.subr.mxu0 0.0
        %275 = vmatpush1.msra.mxu0 0.0
        %276 = vmatprep.subr.mxu0 0.0
        %277 = vmatpush1.msra.mxu0 0.0
        %278 = vmatprep.subr.mxu0 0.0
        %279 = vmatpush1.msra.mxu0 0.0
        %280 = vmatprep.subr.mxu0 0.0
        %281 = vmatpush1.msra.mxu0 0.0
        %282 = vmatprep.subr.mxu0 0.0
        %283 = vmatpush1.msra.mxu0 0.0
        %284 = vmatprep.subr.mxu0 0.0
        %285 = vmatpush1.msra.mxu0 0.0
        %286 = vmatprep.subr.mxu0 0.0
        %287 = vmatpush1.msra.mxu0 0.0
        %288 = vmatprep.mubr.f32.mxu0 0.0
        %289 = vmatmul.mubr.f32.gmra.mrb[0].mxu0 %v219
        %v290 = vpop.f32.mrb[0].mxu0
        %v291 = vadd.f32 %v216, %v290
        %v292 = vpop.f32.mrb[0].mxu0
        %293 = vmatprep.mubr.f32.mxu0 0.0
        %294 = vmatmul.mubr.f32.gmra.mrb[0].mxu0 %v222
        %v295 = vpop.f32.mrb[0].mxu0
        %v296 = vadd.f32 %v216, %v295
        %v297 = vpop.f32.mrb[0].mxu0
        %298 = vdwg.mxu0
        %299 = vst [vmem:[%s164] sm:$0xff] %v291
        %300 = vst [vmem:[%s164 + $0x8] sm:$0xff] %v296
        %s301 = sand.u32 %s93, 1
        %s302 = scalar_lea.sflag [#allocation3], %s301
        %s303 = sand.u32 %s93, 1
        %s304 = smul.addr %s303, 16
        %s305 = scalar_lea.vmem [#allocation2], %s304
        // Predicated region
        $region33: #{shifted_patch_tokenization.1} parent=31 // pred_check
          %p306 = pneg %p103
        $region34: #{shifted_patch_tokenization.1} parent=31 // pred_check_branch
          %308 = sbr.rel (%p306) target = $region36
        $region35: #{shifted_patch_tokenization.1} parent=31 // pred_region
          %s309 = smul.u32 2, %s17
          %s311 = ssub.s32 256, 256
          %312 = vsyncadd %s302, %s311
          %s313 = smul.addr %s309, 128
          %s314 = scalar_lea.hbm %s3, %s313
          %s315 = sshll.u32 %s305, 4
          %s316 = int_to_ptr.vmem [resolvable:$true] %s315
          %321 = dma.vmem_to_hbm [thread:$0]  %s316, 256, %s314, %s302, 128, 128, 8
        $region36: #{shifted_patch_tokenization.1} parent=31 // pred_fallthru
          _
      $region32: #{shifted_patch_tokenization.1} parent=5 // pred_fallthru
        _
      %p322 = scmp.le.s32.totalorder 2, %s12
      // Predicated region
      $region37: #{shifted_patch_tokenization.1} parent=5 // pred_check
        %p323 = pneg %p322
      $region38: #{shifted_patch_tokenization.1} parent=5 // pred_check_branch
        %325 = sbr.rel (%p323) target = $region40
      $region39: #{shifted_patch_tokenization.1} parent=5 // pred_region
        %s326 = ssub.s32 %s12, 2
        // Predicated region
        $region41: #{shifted_patch_tokenization.1} parent=39 // pred_check
          %p327 = pneg %p109
        $region42: #{shifted_patch_tokenization.1} parent=39 // pred_check_branch
          %329 = sbr.rel (%p327) target = $region44
        $region43: #{shifted_patch_tokenization.1} parent=39 // pred_region
          %s330 = sand.u32 %s94, 1
          %s331 = scalar_lea.sflag [#allocation3], %s330
          %s332 = sand.u32 %s94, 1
          %s333 = smul.addr %s332, 16
          %s334 = scalar_lea.vmem [#allocation2], %s333
          %335 = dma.done %s331, 256
        $region44: #{shifted_patch_tokenization.1} parent=39 // pred_fallthru
          _
      $region40: #{shifted_patch_tokenization.1} parent=5 // pred_fallthru
        _
    $region6: #{shifted_patch_tokenization.1} parent=1 // loop_footer
      %s16 = sadd.s32 1, %s12
    $region7: #{shifted_patch_tokenization.1} parent=1 // loop_footer_branch
      %11 = sbr.rel target = $region3
    $region8: #{shifted_patch_tokenization.1} parent=1 // loop_exit
      _
    %336 = vsyncpa [#allocation3], 1
    %s337 = scalar_lea.sflag [#allocation3], 1
    %338 = vsyncpa %s337, 1

</llo_original>
